<compile_context>
chip_gen: v6e
topology: v6e:2x2x1
jax: 0.10.0
libtpu: 0.0.40
codegen_flags: <defaults>
</compile_context>

<pallas_src>
import jax
import jax.numpy as jnp
from jax.experimental import pallas as pl
from jax.experimental.pallas import tpu as pltpu


# Comfortable on v5e/v6e (128 MiB VMEM) and v7x (64 MiB).  On v6e this (and
# the row targets below) can be raised for bigger tiles; on v7x shrink the
# batch block before raising it.  Re-derive for large channel counts.
_VMEM_LIMIT = 32 * 1024 * 1024


# --------------------------------------------------------------------------
# Kernel 1: 3x3 conv (zero pad) + per-grid-step partial BN statistics
# --------------------------------------------------------------------------
def _conv_stats_kernel(x_ref, w_ref, y_ref, sum_ref, ssq_ref):
    # x_ref  : (Nb, Hp, W*Cin)    bf16, H-padded (one zero row top/bottom),
    #                             width unpadded (the band handles W padding)
    # w_ref  : (K, W*Cin, W*Cout) bf16 banded width-unrolled conv weights
    # y_ref  : (Nb*H, W*Cout)     bf16 lane-dense conv output
    # sum_ref, ssq_ref : (1, 1, W*Cout) f32 partial BN sums for this grid step
    Nb, Hp, WCin = x_ref.shape
    K = w_ref.shape[0]
    H = Hp - (K - 1)

    def tap(kh):
        # Row-shifted slab (rows kh .. kh+H of every image in the batch
        # block) flattened to (Nb*H, W*Cin).  Operands arrive as bf16 (cast
        # once in the wrapper); the MXU accumulates in f32.
        lhs = x_ref[:, kh:kh + H, :].reshape(Nb * H, WCin)
        return jnp.dot(lhs, w_ref[kh], preferred_element_type=jnp.float32)

    acc = tap(0)
    for kh in range(1, K):          # K=3 deep matmuls (see MXU-shape note above)
        acc = acc + tap(kh)

    # Per-step partial BatchNorm statistics (reduced over steps + W in glue).
    # No conv bias here: it cancels exactly under training-mode BN, which also
    # keeps |mean| small for the E[x^2]-E[x]^2 variance in the glue.
    # (Folding these sums into an MXU matmul-against-ones is only worth it if
    # a bundle dump ever shows the XLU as the binding slot.)
    sum_ref[0] = jnp.sum(acc, axis=0, keepdims=True)
    ssq_ref[0] = jnp.sum(acc * acc, axis=0, keepdims=True)

    y_ref[...] = acc.astype(y_ref.dtype)          # bf16, lane-dense (128 wide)


# --------------------------------------------------------------------------
# Kernel 2: fused BatchNorm-apply + ReLU on the flat lane-dense slab
# --------------------------------------------------------------------------
def _bn_relu_kernel(y_ref, scale_ref, shift_ref, o_ref):
    # y_ref/o_ref: (RB, W*Cout) bf16; scale/shift: (1, W*Cout) f32
    y = y_ref[...].astype(jnp.float32)
    o_ref[...] = jnp.maximum(y * scale_ref[...] + shift_ref[...],
                             0.0).astype(o_ref.dtype)


# --------------------------------------------------------------------------
# Wrapper helpers
# --------------------------------------------------------------------------
def _pick_batch_block(n, rows_per_image, target_rows=2048, min_steps=4):
    """Batch elements per grid step for kernel 1.

    Largest Nb dividing N such that:
      * the grid has >= min(N, min_steps) steps (so double-buffering actually
        overlaps, and v7x can split the 'parallel' axis across its 2 cores),
      * Nb * rows_per_image <= target_rows (VMEM; raise on v5e/v6e's 128 MiB,
        shrink first on v7x's 64 MiB),
      * (Nb * rows_per_image) % 8 == 0 whenever the grid has more than one
        step (the (8,128) rule for the (Nb*H, W*Cout) output block).
    Falls back to one full-array step (block == full array, rule exempt).
    """
    want = min(n, min_steps)
    for nb in range(n, 0, -1):
        if n % nb:
            continue
        g = n // nb
        if g < want:
            continue
        if nb > 1 and nb * rows_per_image > target_rows:
            continue
        if g > 1 and (nb * rows_per_image) % 8:
            continue
        return nb
    return n


def _pick_row_block(rows, target=2048, min_steps=2):
    """Row tile for the flat (N*H, W*Cout) BN+ReLU slab: multiple of 8,
    divides rows, and leaves the grid at least a couple of steps."""
    cap = (min(target, rows) // 8) * 8
    for rb in range(cap, 7, -8):
        if rows % rb == 0 and rows // rb >= min_steps:
            return rb
    return rows


def _banded_weights(weight_oihw, W):
    """(Cout, Cin, K, K) -> (K, W*Cin, W*Cout) banded width-unrolled weights.

    Row tap kh becomes one banded matrix with
        B_kh[wi*Cin + ci, wo*Cout + co] = weight[co, ci, kh, wi - wo + pad]
    and zero outside the K-wide band.  Width zero-padding is implicit: taps
    that would read outside [0, W) never appear in the band, which is exactly
    what zero padding contributes, so the input only needs H padding.
    """
    Cout, Cin, K, _ = weight_oihw.shape
    pad = (K - 1) // 2
    w_hwio = jnp.transpose(weight_oihw, (2, 3, 1, 0)).astype(jnp.float32)  # (K,K,Cin,Cout)
    wi = jnp.arange(W)[None, :, None]
    wo = jnp.arange(W)[None, None, :]
    kw = jnp.arange(K)[:, None, None]
    band = (wi == wo + kw - pad).astype(jnp.float32)                       # (K, Wi, Wo)
    m = jnp.einsum("qpw,hqio->hpiwo", band, w_hwio)                        # (K,Wi,Cin,Wo,Cout)
    return m.reshape(K, W * Cin, W * Cout).astype(jnp.bfloat16)


# --------------------------------------------------------------------------
# Public forward: Conv2d(3x3, pad 1, bias) -> BatchNorm2d (batch stats) -> ReLU
# --------------------------------------------------------------------------
@jax.jit
def conv_bn_relu(x_nchw, weight_oihw, bias, gamma, beta, eps=1e-5):
    """Forward of the PyTorch `Conv` module. x_nchw: (N, Cin, H, W) float32."""
    N, Cin, H, W = x_nchw.shape
    Cout, _, K, _ = weight_oihw.shape
    pad = (K - 1) // 2                 # padding=1 for the reference 3x3 conv
    Hp = H + 2 * pad
    WCin = W * Cin
    WC = W * Cout

    # `bias` is intentionally unused: a per-channel constant added before
    # training-mode BatchNorm cancels exactly (mean absorbs it, variance is
    # unchanged).  Re-introduce it only for eval-mode BN with running stats.
    del bias

    # TODO(synk): for large W the banded weight grows as K*(W*Cin)*(W*Cout)
    # and wastes ~W/K x MACs; switch to channel-major (H*W, K*K*Cin) im2col
    # with W tiling before that point (worst on v7x's 64 MiB VMEM).
    if K * WCin * WC * 2 > 8 * 1024 * 1024:
        raise NotImplementedError(
            "banded-weight conv path is only intended for small W*C; "
            "use an im2col formulation for large widths/channel counts")

    # NCHW -> H-padded, width-flattened NHWC in bf16.  Transpose + pad + cast
    # fuse into a single XLA scatter into a bf16 zero slab (one ~0.5x-input
    # HBM write); no separate f32 padded slab is materialized, and the W pad
    # lives inside the banded weight.
    x_nhwc = jnp.transpose(x_nchw, (0, 2, 3, 1)).astype(jnp.bfloat16)
    xp = jnp.zeros((N, Hp, WCin), jnp.bfloat16)
    xp = xp.at[:, pad:pad + H, :].set(x_nhwc.reshape(N, H, WCin))

    w_banded = _banded_weights(weight_oihw, W)        # (K, W*Cin, W*Cout) bf16

    Nb = _pick_batch_block(N, H)       # >= min(N,4) grid steps, rows % 8 == 0
    G = N // Nb

    y, psum, pssq = pl.pallas_call(
        _conv_stats_kernel,
        out_shape=(jax.ShapeDtypeStruct((N * H, WC), jnp.bfloat16),
                   jax.ShapeDtypeStruct((G, 1, WC), jnp.float32),
                   jax.ShapeDtypeStruct((G, 1, WC), jnp.float32)),
        grid_spec=pltpu.PrefetchScalarGridSpec(
            num_scalar_prefetch=0,
            grid=(G,),
            in_specs=[
                pl.BlockSpec((Nb, Hp, WCin), lambda g: (g, 0, 0)),
                pl.BlockSpec((K, WCin, WC), lambda g: (0, 0, 0)),
            ],
            out_specs=[
                pl.BlockSpec((Nb * H, WC), lambda g: (g, 0)),
                pl.BlockSpec((1, 1, WC), lambda g: (g, 0, 0)),
                pl.BlockSpec((1, 1, WC), lambda g: (g, 0, 0)),
            ]),
        compiler_params=pltpu.CompilerParams(
            dimension_semantics=("parallel",),   # partial stats: no reduction axis
            vmem_limit_bytes=_VMEM_LIMIT),
    )(xp, w_banded)

    # BatchNorm (training mode): biased variance over (N, H, W) from the
    # per-step partial sums.  E[x^2]-E[x]^2 in f32 with a clamp; the dropped
    # conv bias keeps |mean| small, but switch to mean-shifted / Welford
    # partial sums for very large N*H*W.
    count = float(N * H * W)
    mean = jnp.sum(psum.reshape(G, W, Cout), axis=(0, 1)) / count        # (Cout,)
    var = jnp.sum(pssq.reshape(G, W, Cout), axis=(0, 1)) / count - mean * mean
    var = jnp.maximum(var, 0.0)
    inv = jax.lax.rsqrt(var + eps)
    scale = gamma.astype(jnp.float32) * inv
    shift = beta.astype(jnp.float32) - mean * scale
    scale_row = jnp.tile(scale, W).reshape(1, WC)    # lane-dense rows for kernel 2
    shift_row = jnp.tile(shift, W).reshape(1, WC)

    rows = N * H
    RB = _pick_row_block(rows)

    out = pl.pallas_call(
        _bn_relu_kernel,
        out_shape=jax.ShapeDtypeStruct((rows, WC), jnp.bfloat16),
        grid_spec=pltpu.PrefetchScalarGridSpec(
            num_scalar_prefetch=0,
            grid=(rows // RB,),
            in_specs=[
                pl.BlockSpec((RB, WC), lambda r: (r, 0)),
                pl.BlockSpec((1, WC), lambda r: (0, 0)),
                pl.BlockSpec((1, WC), lambda r: (0, 0)),
            ],
            out_specs=pl.BlockSpec((RB, WC), lambda r: (r, 0))),
        input_output_aliases={0: 0},         # y (bf16) is dead after BN: reuse it
        compiler_params=pltpu.CompilerParams(
            dimension_semantics=("parallel",),
            vmem_limit_bytes=_VMEM_LIMIT),
    )(y, scale_row, shift_row)

    # (N*H, W*Cout) -> (N, H, W, Cout) -> NCHW float32 (PyTorch layout/dtype).
    return jnp.transpose(out.reshape(N, H, W, Cout), (0, 3, 1, 2)
                         ).astype(jnp.float32)


# --------------------------------------------------------------------------
# Pure-JAX reference (PyTorch semantics) + self-test
# --------------------------------------------------------------------------
def _reference(x_nchw, weight, bias, gamma, beta, eps=1e-5):
    y = jax.lax.conv_general_dilated(
        x_nchw.astype(jnp.float32), weight.astype(jnp.float32),
        window_strides=(1, 1), padding=((1, 1), (1, 1)),
        dimension_numbers=("NCHW", "OIHW", "NCHW"))
    y = y + bias.reshape(1, -1, 1, 1)
    mean = y.mean(axis=(0, 2, 3), keepdims=True)
    var = y.var(axis=(0, 2, 3), keepdims=True)   # biased, as BN normalization uses
    y = (y - mean) * jax.lax.rsqrt(var + eps)
    y = y * gamma.reshape(1, -1, 1, 1) + beta.reshape(1, -1, 1, 1)
    return jnp.maximum(y, 0.0)


if __name__ == "__main__":
    N, Cin, H, W = 2, 4, 16, 16
    Cout, K = 8, 3

    key = jax.random.PRNGKey(0)
    kx, kw, kb, kg, kbe = jax.random.split(key, 5)

    x = jax.random.normal(kx, (N, Cin, H, W), dtype=jnp.float32)

    # Deterministic parameter init (shapes match nn.Conv2d / nn.BatchNorm2d).
    fan_in = Cin * K * K
    bound = 1.0 / (fan_in ** 0.5)
    weight = jax.random.uniform(kw, (Cout, Cin, K, K), jnp.float32, -bound, bound)
    bias = jax.random.uniform(kb, (Cout,), jnp.float32, -bound, bound)
    # Non-trivial BN affine params to exercise the scale/shift path.
    gamma = jax.random.uniform(kg, (Cout,), jnp.float32, 0.5, 1.5)
    beta = jax.random.uniform(kbe, (Cout,), jnp.float32, -0.5, 0.5)

    out = jax.block_until_ready(conv_bn_relu(x, weight, bias, gamma, beta))
    ref = _reference(x, weight, bias, gamma, beta)

    assert out.shape == (N, Cout, H, W)
    # bf16 matmul operands, bf16 intermediate y and bf16 pre-transpose output
    # (f32 accumulation / stats / BN math) -> relaxed vs pure-f32 tolerance.
    assert jnp.allclose(out, ref, atol=3e-2, rtol=2e-2), "mismatch vs reference"
    print("KERNEL_OK")
</pallas_src>

<mosaic_0001>
module attributes {stable_mosaic.version = 11 : i64} {
  func.func @_conv_stats_kernel(%arg0: i32, %arg1: memref<1x18x64xbf16, #tpu.memory_space<vmem>>, %arg2: memref<3x64x128xbf16, #tpu.memory_space<vmem>>, %arg3: memref<16x128xbf16, #tpu.memory_space<vmem>>, %arg4: memref<1x1x128xf32, #tpu.memory_space<vmem>>, %arg5: memref<1x1x128xf32, #tpu.memory_space<vmem>>) attributes {dimension_semantics = [#tpu.dimension_semantics<parallel>], iteration_bounds = array<i64: 2>, scalar_prefetch = 0 : i64, scratch_operands = 0 : i64, tpu.core_type = #tpu.core_type<tc>, window_params = [{transform_indices = @transform_0, window_bounds = array<i64: 1, 18, 64>}, {pipeline_mode = #tpu.pipeline_mode<synchronous>, transform_indices = @transform_1, window_bounds = array<i64: 3, 64, 128>}, {transform_indices = @transform_2, window_bounds = array<i64: 16, 128>}, {transform_indices = @transform_3, window_bounds = array<i64: 1, 1, 128>}, {transform_indices = @transform_4, window_bounds = array<i64: 1, 1, 128>}]} {
    %c0 = arith.constant 0 : index
    %c0_0 = arith.constant 0 : index
    %c0_1 = arith.constant 0 : index
    %0 = vector.load %arg1[%c0, %c0_0, %c0_1] : memref<1x18x64xbf16, #tpu.memory_space<vmem>>, vector<1x16x64xbf16>
    %1 = vector.shape_cast %0 : vector<1x16x64xbf16> to vector<16x64xbf16>
    %c0_2 = arith.constant 0 : index
    %c0_3 = arith.constant 0 : index
    %c0_4 = arith.constant 0 : index
    %2 = vector.load %arg2[%c0_2, %c0_3, %c0_4] : memref<3x64x128xbf16, #tpu.memory_space<vmem>>, vector<1x64x128xbf16>
    %3 = vector.shape_cast %2 : vector<1x64x128xbf16> to vector<64x128xbf16>
    %cst = arith.constant dense<0.000000e+00> : vector<16x128xf32>
    %4 = tpu.matmul %1, %3, %cst {dimension_numbers = #tpu.dot_dimension_numbers<[1], [0], [0], [1], [0, 0, 1, 1], [], []>} : vector<16x64xbf16>, vector<64x128xbf16>, vector<16x128xf32> -> vector<16x128xf32>
    %c0_5 = arith.constant 0 : index
    %c1 = arith.constant 1 : index
    %c0_6 = arith.constant 0 : index
    %5 = vector.load %arg1[%c0_5, %c1, %c0_6] : memref<1x18x64xbf16, #tpu.memory_space<vmem>>, vector<1x16x64xbf16>
    %6 = vector.shape_cast %5 : vector<1x16x64xbf16> to vector<16x64xbf16>
    %c1_7 = arith.constant 1 : index
    %c0_8 = arith.constant 0 : index
    %c0_9 = arith.constant 0 : index
    %7 = vector.load %arg2[%c1_7, %c0_8, %c0_9] : memref<3x64x128xbf16, #tpu.memory_space<vmem>>, vector<1x64x128xbf16>
    %8 = vector.shape_cast %7 : vector<1x64x128xbf16> to vector<64x128xbf16>
    %cst_10 = arith.constant dense<0.000000e+00> : vector<16x128xf32>
    %9 = tpu.matmul %6, %8, %cst_10 {dimension_numbers = #tpu.dot_dimension_numbers<[1], [0], [0], [1], [0, 0, 1, 1], [], []>} : vector<16x64xbf16>, vector<64x128xbf16>, vector<16x128xf32> -> vector<16x128xf32>
    %10 = arith.addf %4, %9 : vector<16x128xf32>
    %c0_11 = arith.constant 0 : index
    %c2 = arith.constant 2 : index
    %c0_12 = arith.constant 0 : index
    %11 = vector.load %arg1[%c0_11, %c2, %c0_12] : memref<1x18x64xbf16, #tpu.memory_space<vmem>>, vector<1x16x64xbf16>
    %12 = vector.shape_cast %11 : vector<1x16x64xbf16> to vector<16x64xbf16>
    %c2_13 = arith.constant 2 : index
    %c0_14 = arith.constant 0 : index
    %c0_15 = arith.constant 0 : index
    %13 = vector.load %arg2[%c2_13, %c0_14, %c0_15] : memref<3x64x128xbf16, #tpu.memory_space<vmem>>, vector<1x64x128xbf16>
    %14 = vector.shape_cast %13 : vector<1x64x128xbf16> to vector<64x128xbf16>
    %cst_16 = arith.constant dense<0.000000e+00> : vector<16x128xf32>
    %15 = tpu.matmul %12, %14, %cst_16 {dimension_numbers = #tpu.dot_dimension_numbers<[1], [0], [0], [1], [0, 0, 1, 1], [], []>} : vector<16x64xbf16>, vector<64x128xbf16>, vector<16x128xf32> -> vector<16x128xf32>
    %16 = arith.addf %10, %15 : vector<16x128xf32>
    %cst_17 = arith.constant dense<0.000000e+00> : vector<128xf32>
    %17 = vector.multi_reduction <add>, %16, %cst_17 [0] : vector<16x128xf32> to vector<128xf32>
    %18 = vector.shape_cast %17 : vector<128xf32> to vector<1x128xf32>
    %c0_18 = arith.constant 0 : index
    %c0_19 = arith.constant 0 : index
    %c0_20 = arith.constant 0 : index
    %19 = vector.load %arg4[%c0_18, %c0_19, %c0_20] : memref<1x1x128xf32, #tpu.memory_space<vmem>>, vector<1x1x128xf32>
    %20 = vector.shape_cast %19 : vector<1x1x128xf32> to vector<1x128xf32>
    %21 = vector.shape_cast %18 : vector<1x128xf32> to vector<1x1x128xf32>
    tpu.vector_store %arg4[%c0_18, %c0_19, %c0_20], %21 {strides = array<i32>} : memref<1x1x128xf32, #tpu.memory_space<vmem>>, vector<1x1x128xf32>,
    %22 = arith.mulf %16, %16 : vector<16x128xf32>
    %cst_21 = arith.constant dense<0.000000e+00> : vector<128xf32>
    %23 = vector.multi_reduction <add>, %22, %cst_21 [0] : vector<16x128xf32> to vector<128xf32>
    %24 = vector.shape_cast %23 : vector<128xf32> to vector<1x128xf32>
    %c0_22 = arith.constant 0 : index
    %c0_23 = arith.constant 0 : index
    %c0_24 = arith.constant 0 : index
    %25 = vector.load %arg5[%c0_22, %c0_23, %c0_24] : memref<1x1x128xf32, #tpu.memory_space<vmem>>, vector<1x1x128xf32>
    %26 = vector.shape_cast %25 : vector<1x1x128xf32> to vector<1x128xf32>
    %27 = vector.shape_cast %24 : vector<1x128xf32> to vector<1x1x128xf32>
    tpu.vector_store %arg5[%c0_22, %c0_23, %c0_24], %27 {strides = array<i32>} : memref<1x1x128xf32, #tpu.memory_space<vmem>>, vector<1x1x128xf32>,
    %28 = arith.truncf %16 : vector<16x128xf32> to vector<16x128xbf16>
    %c0_25 = arith.constant 0 : index
    %c0_26 = arith.constant 0 : index
    %29 = vector.load %arg3[%c0_25, %c0_26] : memref<16x128xbf16, #tpu.memory_space<vmem>>, vector<16x128xbf16>
    tpu.vector_store %arg3[%c0_25, %c0_26], %28 {strides = array<i32>} : memref<16x128xbf16, #tpu.memory_space<vmem>>, vector<16x128xbf16>,
    return
  }
  func.func @transform_0(%arg0: i32) -> (i32, i32, i32) {
    %c0_i32 = arith.constant 0 : i32
    %c0_i32_0 = arith.constant 0 : i32
    %c0_i32_1 = arith.constant 0 : i32
    return %arg0, %c0_i32, %c0_i32_0 : i32, i32, i32
  }
  func.func @transform_1(%arg0: i32) -> (i32, i32, i32) {
    %c0_i32 = arith.constant 0 : i32
    %c0_i32_0 = arith.constant 0 : i32
    %c0_i32_1 = arith.constant 0 : i32
    %c0_i32_2 = arith.constant 0 : i32
    return %c0_i32, %c0_i32_0, %c0_i32_1 : i32, i32, i32
  }
  func.func @transform_2(%arg0: i32) -> (i32, i32) {
    %c0_i32 = arith.constant 0 : i32
    %c0_i32_0 = arith.constant 0 : i32
    return %arg0, %c0_i32 : i32, i32
  }
  func.func @transform_3(%arg0: i32) -> (i32, i32, i32) {
    %c0_i32 = arith.constant 0 : i32
    %c0_i32_0 = arith.constant 0 : i32
    %c0_i32_1 = arith.constant 0 : i32
    return %arg0, %c0_i32, %c0_i32_0 : i32, i32, i32
  }
  func.func @transform_4(%arg0: i32) -> (i32, i32, i32) {
    %c0_i32 = arith.constant 0 : i32
    %c0_i32_0 = arith.constant 0 : i32
    %c0_i32_1 = arith.constant 0 : i32
    return %arg0, %c0_i32, %c0_i32_0 : i32, i32, i32
  }
}

module attributes {stable_mosaic.version = 11 : i64} {
  func.func @_bn_relu_kernel(%arg0: i32, %arg1: memref<16x128xbf16, #tpu.memory_space<vmem>>, %arg2: memref<1x128xf32, #tpu.memory_space<vmem>>, %arg3: memref<1x128xf32, #tpu.memory_space<vmem>>, %arg4: memref<16x128xbf16, #tpu.memory_space<vmem>>) attributes {dimension_semantics = [#tpu.dimension_semantics<parallel>], iteration_bounds = array<i64: 2>, scalar_prefetch = 0 : i64, scratch_operands = 0 : i64, tpu.core_type = #tpu.core_type<tc>, window_params = [{transform_indices = @transform_0, window_bounds = array<i64: 16, 128>}, {pipeline_mode = #tpu.pipeline_mode<synchronous>, transform_indices = @transform_1, window_bounds = array<i64: 1, 128>}, {pipeline_mode = #tpu.pipeline_mode<synchronous>, transform_indices = @transform_2, window_bounds = array<i64: 1, 128>}, {transform_indices = @transform_3, window_bounds = array<i64: 16, 128>}]} {
    %c0 = arith.constant 0 : index
    %c0_0 = arith.constant 0 : index
    %0 = vector.load %arg1[%c0, %c0_0] : memref<16x128xbf16, #tpu.memory_space<vmem>>, vector<16x128xbf16>
    %1 = arith.extf %0 : vector<16x128xbf16> to vector<16x128xf32>
    %c0_1 = arith.constant 0 : index
    %c0_2 = arith.constant 0 : index
    %2 = vector.load %arg2[%c0_1, %c0_2] : memref<1x128xf32, #tpu.memory_space<vmem>>, vector<1x128xf32>
    %3 = vector.broadcast %2 : vector<1x128xf32> to vector<16x128xf32>
    %4 = arith.mulf %1, %3 : vector<16x128xf32>
    %c0_3 = arith.constant 0 : index
    %c0_4 = arith.constant 0 : index
    %5 = vector.load %arg3[%c0_3, %c0_4] : memref<1x128xf32, #tpu.memory_space<vmem>>, vector<1x128xf32>
    %6 = vector.broadcast %5 : vector<1x128xf32> to vector<16x128xf32>
    %7 = arith.addf %4, %6 : vector<16x128xf32>
    %cst = arith.constant 0.000000e+00 : f32
    %8 = vector.broadcast %cst : f32 to vector<16x128xf32>
    %9 = arith.maximumf %7, %8 : vector<16x128xf32>
    %10 = arith.truncf %9 : vector<16x128xf32> to vector<16x128xbf16>
    %c0_5 = arith.constant 0 : index
    %c0_6 = arith.constant 0 : index
    %11 = vector.load %arg4[%c0_5, %c0_6] : memref<16x128xbf16, #tpu.memory_space<vmem>>, vector<16x128xbf16>
    tpu.vector_store %arg4[%c0_5, %c0_6], %10 {strides = array<i32>} : memref<16x128xbf16, #tpu.memory_space<vmem>>, vector<16x128xbf16>,
    return
  }
  func.func @transform_0(%arg0: i32) -> (i32, i32) {
    %c0_i32 = arith.constant 0 : i32
    %c0_i32_0 = arith.constant 0 : i32
    return %arg0, %c0_i32 : i32, i32
  }
  func.func @transform_1(%arg0: i32) -> (i32, i32) {
    %c0_i32 = arith.constant 0 : i32
    %c0_i32_0 = arith.constant 0 : i32
    %c0_i32_1 = arith.constant 0 : i32
    return %c0_i32, %c0_i32_0 : i32, i32
  }
  func.func @transform_2(%arg0: i32) -> (i32, i32) {
    %c0_i32 = arith.constant 0 : i32
    %c0_i32_0 = arith.constant 0 : i32
    %c0_i32_1 = arith.constant 0 : i32
    return %c0_i32, %c0_i32_0 : i32, i32
  }
  func.func @transform_3(%arg0: i32) -> (i32, i32) {
    %c0_i32 = arith.constant 0 : i32
    %c0_i32_0 = arith.constant 0 : i32
    return %arg0, %c0_i32 : i32, i32
  }
}

</mosaic_0001>

<llo_original>
// kernel: tile.13
$region0: #{tile.13}
  #allocation0 [shape = 's32[1]{0}', space=sflag, size = 0x4, scoped, tag = 'scoped memory for tile.13']
  %s0 = inlined_call_operand.vmem [shape: f32[8], index: 0, kind: input, shape index: {}]
  %s1 = inlined_call_operand.vmem [shape: f32[16,8], index: 1, kind: output, shape index: {}]
  // Predicated region
  $region2: #{tile.13} parent=0 // pred_check
    _
  $region3: #{tile.13} parent=0 // pred_check_branch
    %3 = sbr.rel (0) target = $region5
  $region4: #{tile.13} parent=0 // pred_region
    _
  $region5: #{tile.13} parent=0 // pred_fallthru
    _
  %v4 = vld [vmem:[%s0] ss:$0 sm:$0xff]
  %5 = vst [vmem:[%s1] sm:$0xff] %v4
  %s6 = scalar_lea.vmem %s1, 8
  %7 = vst [vmem:[%s6] sm:$0xff] %v4

// kernel: tile.14
$region0: #{tile.14}
  %s0 = inlined_call_operand.vmem [shape: f32[16,8], index: 0, kind: input, shape index: {}]
  %s1 = inlined_call_operand.vmem [shape: f32[1,128], index: 1, kind: output, shape index: {}]
  $region1: #{tile.14} parent=0
    #allocation0 [shape = 'u8[4096]{0}', space=vmem, size = 0x1000, scoped, tag = 'scoped mem for output reshape']
    %v2 = vld [vmem:[%s0] sm:$0x1]
    %vm3 = vcmask 64512
    %4 = vst.msk [vmem:[#allocation0] sm:$0x1] %vm3, %v2
    %s5 = scalar_lea.vmem %s0, 15
    %v6 = vld [vmem:[%s5] sm:$0x1]
    %7 = vrot.lane.b32.xlu0 %v6, 120
    %v8 = vpop.permute.xlu0 %7
    %vm9 = vcmask 1048512
    %10 = vst.msk [vmem:[#allocation0] sm:$0x1] %vm9, %v8
    %s11 = scalar_lea.vmem %s0, 14
    %v12 = vld [vmem:[%s11] sm:$0x1]
    %13 = vrot.lane.b32.xlu0 %v12, 112
    %v14 = vpop.permute.xlu0 %13
    %vm15 = vcmask 982912
    %16 = vst.msk [vmem:[#allocation0] sm:$0x1] %vm15, %v14
    %s17 = scalar_lea.vmem %s0, 13
    %v18 = vld [vmem:[%s17] sm:$0x1]
    %19 = vrot.lane.b32.xlu0 %v18, 104
    %v20 = vpop.permute.xlu0 %19
    %vm21 = vcmask 917312
    %22 = vst.msk [vmem:[#allocation0] sm:$0x1] %vm21, %v20
    %s23 = scalar_lea.vmem %s0, 12
    %v24 = vld [vmem:[%s23] sm:$0x1]
    %25 = vrot.lane.b32.xlu0 %v24, 96
    %v26 = vpop.permute.xlu0 %25
    %vm27 = vcmask 851712
    %28 = vst.msk [vmem:[#allocation0] sm:$0x1] %vm27, %v26
    %s29 = scalar_lea.vmem %s0, 11
    %v30 = vld [vmem:[%s29] sm:$0x1]
    %31 = vrot.lane.b32.xlu0 %v30, 88
    %v32 = vpop.permute.xlu0 %31
    %vm33 = vcmask 786112
    %34 = vst.msk [vmem:[#allocation0] sm:$0x1] %vm33, %v32
    %s35 = scalar_lea.vmem %s0, 10
    %v36 = vld [vmem:[%s35] sm:$0x1]
    %37 = vrot.lane.b32.xlu0 %v36, 80
    %v38 = vpop.permute.xlu0 %37
    %vm39 = vcmask 720512
    %40 = vst.msk [vmem:[#allocation0] sm:$0x1] %vm39, %v38
    %s41 = scalar_lea.vmem %s0, 9
    %v42 = vld [vmem:[%s41] sm:$0x1]
    %43 = vrot.lane.b32.xlu0 %v42, 72
    %v44 = vpop.permute.xlu0 %43
    %vm45 = vcmask 654912
    %46 = vst.msk [vmem:[#allocation0] sm:$0x1] %vm45, %v44
    %s47 = scalar_lea.vmem %s0, 8
    %v48 = vld [vmem:[%s47] sm:$0x1]
    %49 = vrot.lane.b32.xlu0 %v48, 64
    %v50 = vpop.permute.xlu0 %49
    %vm51 = vcmask 589312
    %52 = vst.msk [vmem:[#allocation0] sm:$0x1] %vm51, %v50
    %s53 = scalar_lea.vmem %s0, 7
    %v54 = vld [vmem:[%s53] sm:$0x1]
    %55 = vrot.lane.b32.xlu0 %v54, 56
    %v56 = vpop.permute.xlu0 %55
    %vm57 = vcmask 523712
    %58 = vst.msk [vmem:[#allocation0] sm:$0x1] %vm57, %v56
    %s59 = scalar_lea.vmem %s0, 6
    %v60 = vld [vmem:[%s59] sm:$0x1]
    %61 = vrot.lane.b32.xlu0 %v60, 48
    %v62 = vpop.permute.xlu0 %61
    %vm63 = vcmask 458112
    %64 = vst.msk [vmem:[#allocation0] sm:$0x1] %vm63, %v62
    %s65 = scalar_lea.vmem %s0, 5
    %v66 = vld [vmem:[%s65] sm:$0x1]
    %67 = vrot.lane.b32.xlu0 %v66, 40
    %v68 = vpop.permute.xlu0 %67
    %vm69 = vcmask 392512
    %70 = vst.msk [vmem:[#allocation0] sm:$0x1] %vm69, %v68
    %s71 = scalar_lea.vmem %s0, 4
    %v72 = vld [vmem:[%s71] sm:$0x1]
    %73 = vrot.lane.b32.xlu0 %v72, 32
    %v74 = vpop.permute.xlu0 %73
    %vm75 = vcmask 326912
    %76 = vst.msk [vmem:[#allocation0] sm:$0x1] %vm75, %v74
    %s77 = scalar_lea.vmem %s0, 3
    %v78 = vld [vmem:[%s77] sm:$0x1]
    %79 = vrot.lane.b32.xlu0 %v78, 24
    %v80 = vpop.permute.xlu0 %79
    %vm81 = vcmask 261312
    %82 = vst.msk [vmem:[#allocation0] sm:$0x1] %vm81, %v80
    %s83 = scalar_lea.vmem %s0, 2
    %v84 = vld [vmem:[%s83] sm:$0x1]
    %85 = vrot.lane.b32.xlu0 %v84, 16
    %v86 = vpop.permute.xlu0 %85
    %vm87 = vcmask 195712
    %88 = vst.msk [vmem:[#allocation0] sm:$0x1] %vm87, %v86
    %s89 = scalar_lea.vmem %s0, 1
    %v90 = vld [vmem:[%s89] sm:$0x1]
    %91 = vrot.lane.b32.xlu0 %v90, 8
    %v92 = vpop.permute.xlu0 %91
    %vm93 = vcmask 130112
    %94 = vst.msk [vmem:[#allocation0] sm:$0x1] %vm93, %v92
    %s96 = sshll.u32 1, 1
    %s97 = ssub.s32 %s96, 1
    %v99 = vld [vmem:[#allocation0] sm:%s97]
    %s100 = sshll.u32 1, 1
    %s101 = ssub.s32 %s100, 1
    %102 = vst [vmem:[%s1] sm:%s101] %v99

// kernel: conv_bn_relu.3
$region0: #{conv_bn_relu.3}
  #allocation0 [shape = 'u32[]', space=smem, size = 0x4, offset = 0x4, fixed_abs, tag = 'smem constant byte address 0x4 - core index']
  #allocation1 [shape = 'u32[144,128]{1,0:T(1,128)}', space=vmem, size = 0x12000, scoped, tag = 'internal scratch']
  %s0 = inlined_call_operand.vmem [shape: bf16[32,128], index: 0, kind: input, shape index: {}, may-alias: {0,3}]
  %s1 = inlined_call_operand.vmem [shape: f32[1,128], index: 1, kind: input, shape index: {}]
  %s2 = inlined_call_operand.vmem [shape: f32[1,128], index: 2, kind: input, shape index: {}]
  %s3 = inlined_call_operand.vmem [shape: bf16[32,128], index: 3, kind: output, shape index: {}, may-alias: {0,3}]
  %s4 = sld [smem:[#allocation0]]
  $region45: #{conv_bn_relu.3} parent=0
    _
  %s6 = ssub.s32 1, %s4
  %s7 = scalar_select 0, %s6, %s4
  loop: start=0, step=1, limit=4
  $region2: #{conv_bn_relu.3} parent=0 // loop_pre_header
    _
  $region3: #{conv_bn_relu.3} parent=0 // loop_header
    %s9 = sphi 0, %s13
    %p10 = scmp.ge.s32.totalorder %s9, 4
    %s19 = sphi 0, %s21
    %s22 = sphi 0, %s19
    %s23 = sphi 0, %s22
    %s39 = sphi 0, %s23
    %s43 = sphi 0, %s43
    %s45 = sphi 0, %s43
    %s46 = sphi 0, %s45
    %s60 = sphi 0, %s46
    %s64 = sphi 0, %s64
    %s66 = sphi 0, %s64
    %s67 = sphi 0, %s66
    %s81 = sphi 0, %s67
    %s87 = sphi 0, %s89
    %s90 = sphi 0, %s87
    %s91 = sphi 0, %s90
    %s107 = sphi 0, %s91
  $region4: #{conv_bn_relu.3} parent=0 // loop_header_branch
    %12 = sbr.rel (%p10) target = $region8
  $region5: #{conv_bn_relu.3} parent=0 // loop_body
    %s14 = ssub.s32 %s9, 1
    %s15 = ssub.s32 %s9, 2
    %s16 = sadd.s32 %s9, 1
    %s17 = ssub.s32 %s9, %s16
    %p18 = scmp.eq.s32.totalorder %s17, 0
    %s20 = sadd.s32 %s19, 1
    %s21 = scalar_select %p18, %s19, %s20
    %p24 = pneg %p18
    %p25 = scmp.eq.s32.totalorder %s9, 1
    %p26 = por %p24, %p25
    %p27 = scmp.ne.s32.totalorder %s19, %s22
    %p28 = scmp.eq.s32.totalorder %s9, 0
    %p29 = por %p27, %p28
    %p30 = scmp.ne.s32.totalorder %s19, %s22
    %p31 = scmp.eq.s32.totalorder %s14, 1
    %p32 = por %p30, %p31
    %p33 = scmp.ne.s32.totalorder %s22, %s23
    %p34 = scmp.eq.s32.totalorder %s14, 0
    %p35 = por %p33, %p34
    %p36 = scmp.ne.s32.totalorder %s22, %s23
    %p37 = scmp.eq.s32.totalorder %s15, 1
    %p38 = por %p36, %p37
    %p40 = scmp.ne.s32.totalorder %s23, %s39
    %p41 = scmp.eq.s32.totalorder %s15, 0
    %p42 = por %p40, %p41
    %s44 = sadd.s32 %s43, 1
    %p47 = scmp.eq.s32.totalorder %s9, 1
    %p48 = scmp.ne.s32.totalorder %s43, %s45
    %p49 = scmp.eq.s32.totalorder %s9, 0
    %p50 = por %p48, %p49
    %p51 = scmp.ne.s32.totalorder %s43, %s45
    %p52 = scmp.eq.s32.totalorder %s14, 1
    %p53 = por %p51, %p52
    %p54 = scmp.ne.s32.totalorder %s45, %s46
    %p55 = scmp.eq.s32.totalorder %s14, 0
    %p56 = por %p54, %p55
    %p57 = scmp.ne.s32.totalorder %s45, %s46
    %p58 = scmp.eq.s32.totalorder %s15, 1
    %p59 = por %p57, %p58
    %p61 = scmp.ne.s32.totalorder %s46, %s60
    %p62 = scmp.eq.s32.totalorder %s15, 0
    %p63 = por %p61, %p62
    %s65 = sadd.s32 %s64, 1
    %p68 = scmp.eq.s32.totalorder %s9, 1
    %p69 = scmp.ne.s32.totalorder %s64, %s66
    %p70 = scmp.eq.s32.totalorder %s9, 0
    %p71 = por %p69, %p70
    %p72 = scmp.ne.s32.totalorder %s64, %s66
    %p73 = scmp.eq.s32.totalorder %s14, 1
    %p74 = por %p72, %p73
    %p75 = scmp.ne.s32.totalorder %s66, %s67
    %p76 = scmp.eq.s32.totalorder %s14, 0
    %p77 = por %p75, %p76
    %p78 = scmp.ne.s32.totalorder %s66, %s67
    %p79 = scmp.eq.s32.totalorder %s15, 1
    %p80 = por %p78, %p79
    %p82 = scmp.ne.s32.totalorder %s67, %s81
    %p83 = scmp.eq.s32.totalorder %s15, 0
    %p84 = por %p82, %p83
    %s85 = ssub.s32 %s9, %s16
    %p86 = scmp.eq.s32.totalorder %s85, 0
    %s88 = sadd.s32 %s87, 1
    %s89 = scalar_select %p86, %s87, %s88
    %p92 = pneg %p86
    %p93 = scmp.eq.s32.totalorder %s9, 1
    %p94 = por %p92, %p93
    %p95 = scmp.ne.s32.totalorder %s87, %s90
    %p96 = scmp.eq.s32.totalorder %s9, 0
    %p97 = por %p95, %p96
    %p98 = scmp.ne.s32.totalorder %s87, %s90
    %p99 = scmp.eq.s32.totalorder %s14, 1
    %p100 = por %p98, %p99
    %p101 = scmp.ne.s32.totalorder %s90, %s91
    %p102 = scmp.eq.s32.totalorder %s14, 0
    %p103 = por %p101, %p102
    %p104 = scmp.ne.s32.totalorder %s90, %s91
    %p105 = scmp.eq.s32.totalorder %s15, 1
    %p106 = por %p104, %p105
    %p108 = scmp.ne.s32.totalorder %s91, %s107
    %p109 = scmp.eq.s32.totalorder %s15, 0
    %p110 = por %p108, %p109
    %p111 = scmp.le.s32.totalorder 1, %s9
    %p112 = scmp.lt.s32.totalorder %s9, 3
    %p113 = pnand %p111, %p112
    %p114 = pneg %p113
    // Predicated region
    $region9: #{conv_bn_relu.3} parent=5 // pred_check
      _
    $region10: #{conv_bn_relu.3} parent=5 // pred_check_branch
      %116 = sbr.rel (%p113) target = $region12
    $region11: #{conv_bn_relu.3} parent=5 // pred_region
      %s117 = ssub.s32 %s9, 1
      // Predicated region
      $region13: #{conv_bn_relu.3} parent=11 // pred_check
        %p118 = pneg %p56
      $region14: #{conv_bn_relu.3} parent=11 // pred_check_branch
        %120 = sbr.rel (%p118) target = $region16
      $region15: #{conv_bn_relu.3} parent=11 // pred_region
        _
      $region16: #{conv_bn_relu.3} parent=11 // pred_fallthru
        _
      // Predicated region
      $region17: #{conv_bn_relu.3} parent=11 // pred_check
        %p121 = pneg %p77
      $region18: #{conv_bn_relu.3} parent=11 // pred_check_branch
        %123 = sbr.rel (%p121) target = $region20
      $region19: #{conv_bn_relu.3} parent=11 // pred_region
        _
      $region20: #{conv_bn_relu.3} parent=11 // pred_fallthru
        _
    $region12: #{conv_bn_relu.3} parent=5 // pred_fallthru
      _
    %p124 = scmp.lt.s32.totalorder %s9, 2
    // Predicated region
    $region21: #{conv_bn_relu.3} parent=5 // pred_check
      %p125 = pneg %p124
    $region22: #{conv_bn_relu.3} parent=5 // pred_check_branch
      %127 = sbr.rel (%p125) target = $region24
    $region23: #{conv_bn_relu.3} parent=5 // pred_region
      // Predicated region
      $region25: #{conv_bn_relu.3} parent=23 // pred_check
        %p128 = pneg %p29
      $region26: #{conv_bn_relu.3} parent=23 // pred_check_branch
        %130 = sbr.rel (%p128) target = $region28
      $region27: #{conv_bn_relu.3} parent=23 // pred_region
        %s131 = smul.u32 2, %s9
        %p132 = scmp.lt.s32.totalorder %s131, 3
        %s133 = scalar_select %p132, %s131, 3
        %s134 = smul.addr %s133, 4
        %s135 = scalar_lea.vmem %s0, %s134
        %s136 = smul.u32 2, %s9
      $region28: #{conv_bn_relu.3} parent=23 // pred_fallthru
        _
    $region24: #{conv_bn_relu.3} parent=5 // pred_fallthru
      _
    %p137 = scmp.le.s32.totalorder 1, %s9
    %p138 = scmp.lt.s32.totalorder %s9, 3
    %p139 = pnand %p137, %p138
    %p140 = pneg %p139
    // Predicated region
    $region29: #{conv_bn_relu.3} parent=5 // pred_check
      _
    $region30: #{conv_bn_relu.3} parent=5 // pred_check_branch
      %142 = sbr.rel (%p139) target = $region32
    $region31: #{conv_bn_relu.3} parent=5 // pred_region
      %s143 = ssub.s32 %s9, 1
      %s144 = smul.u32 2, %s14
      %p145 = scmp.lt.s32.totalorder %s144, 3
      %s146 = scalar_select %p145, %s144, 3
      %s147 = smul.addr %s146, 4
      %s148 = scalar_lea.vmem %s0, %s147
      %p149 = pneg %p35
      %p150 = pneg %p32
      %p151 = pneg %p56
      %p152 = pneg %p53
      %p153 = pneg %p77
      %p154 = pneg %p74
      %p155 = pneg %p103
      %p156 = pneg %p100
      %s157 = smul.u32 2, %s14
      %p158 = scmp.lt.s32.totalorder %s157, 3
      %s159 = scalar_select %p158, %s157, 3
      %s160 = smul.addr %s159, 4
      %s161 = scalar_lea.vmem %s3, %s160
      %s162 = smul.u32 2, %s14
      %p163 = scmp.lt.s32.totalorder %s162, 3
      %s164 = scalar_select %p163, %s162, 3
      %s165 = smul.addr %s164, 4
      %s166 = scalar_lea.vmem %s0, %s165
      %s167 = smul.u32 2, %s14
      %s168 = smul.u32 2, %s14
      %p169 = scmp.lt.s32.totalorder %s168, 3
      %s170 = scalar_select %p169, %s168, 3
      %s171 = smul.addr %s170, 4
      %s172 = scalar_lea.vmem %s3, %s171
      %s173 = smul.u32 2, %s14
      %v174 = vld [vmem:[%s166] sm:$0xf]
      %v175 = vld [vmem:[%s166 + $0x4] sm:$0xf]
      %v176 = vunpack.c.l.bf16 %v174
      %v177 = vunpack.c.l.bf16 %v175
      %v178 = vld [vmem:[%s1] sm:$0x1]
      %v180 = vlaneseq
      %v181 = vshrl.u32 %v180, 7
      %v182 = vsub.s32 0, %v181
      %v183 = vrot.slane %v178, %v182
      %v185 = vmul.f32 %v176, %v183
      %v186 = vmul.f32 %v177, %v183
      %v187 = vld [vmem:[%s2] sm:$0x1]
      %v189 = vlaneseq
      %v190 = vshrl.u32 %v189, 7
      %v191 = vsub.s32 0, %v190
      %v192 = vrot.slane %v187, %v191
      %v194 = vadd.f32 %v185, %v192
      %v195 = vadd.f32 %v186, %v192
      %v196 = vmax.f32 %v194, 0.0
      %v197 = vmax.f32 %v195, 0.0
      %v198 = vpack.c.bf16 %v197, %v196
      %v200 = vunpack.c.l.b16 %v198
      %v201 = vunpack.c.h.b16 %v198
      %v202 = vpack.c.b16 %v200, %v200
      %v203 = vpack.c.b16 %v201, %v201
      %206 = vst [vmem:[%s172] sm:$0xf] %v202
      %207 = vst [vmem:[%s172 + $0x4] sm:$0xf] %v203
      %s208 = smul.u32 2, %s14
      %p209 = scmp.lt.s32.totalorder %s208, 3
      %s210 = scalar_select %p209, %s208, 3
      %s211 = smul.addr %s210, 4
      %s212 = scalar_lea.vmem %s3, %s211
      // Predicated region
      $region33: #{conv_bn_relu.3} parent=31 // pred_check
        %p213 = pneg %p100
      $region34: #{conv_bn_relu.3} parent=31 // pred_check_branch
        %215 = sbr.rel (%p213) target = $region36
      $region35: #{conv_bn_relu.3} parent=31 // pred_region
        %s216 = smul.u32 2, %s14
      $region36: #{conv_bn_relu.3} parent=31 // pred_fallthru
        _
    $region32: #{conv_bn_relu.3} parent=5 // pred_fallthru
      _
    %p217 = scmp.le.s32.totalorder 2, %s9
    // Predicated region
    $region37: #{conv_bn_relu.3} parent=5 // pred_check
      %p218 = pneg %p217
    $region38: #{conv_bn_relu.3} parent=5 // pred_check_branch
      %220 = sbr.rel (%p218) target = $region40
    $region39: #{conv_bn_relu.3} parent=5 // pred_region
      %s221 = ssub.s32 %s9, 2
      // Predicated region
      $region41: #{conv_bn_relu.3} parent=39 // pred_check
        %p222 = pneg %p106
      $region42: #{conv_bn_relu.3} parent=39 // pred_check_branch
        %224 = sbr.rel (%p222) target = $region44
      $region43: #{conv_bn_relu.3} parent=39 // pred_region
        %s225 = smul.u32 2, %s15
        %p226 = scmp.lt.s32.totalorder %s225, 3
        %s227 = scalar_select %p226, %s225, 3
        %s228 = smul.addr %s227, 4
        %s229 = scalar_lea.vmem %s3, %s228
      $region44: #{conv_bn_relu.3} parent=39 // pred_fallthru
        _
    $region40: #{conv_bn_relu.3} parent=5 // pred_fallthru
      _
  $region6: #{conv_bn_relu.3} parent=0 // loop_footer
    %s13 = sadd.s32 1, %s9
  $region7: #{conv_bn_relu.3} parent=0 // loop_footer_branch
    %8 = sbr.rel target = $region3
  $region8: #{conv_bn_relu.3} parent=0 // loop_exit
    _

// kernel: conv_bn_relu.2
$region0: #{conv_bn_relu.2}
  #allocation0 [shape = 'u32[]', space=smem, size = 0x4, offset = 0x4, fixed_abs, tag = 'smem constant byte address 0x4 - core index']
  #allocation1 [shape = 'u32[144,128]{1,0:T(1,128)}', space=vmem, size = 0x12000, scoped, tag = 'internal scratch']
  %s0 = inlined_call_operand.vmem [shape: bf16[2,18,64], index: 0, kind: input, shape index: {}]
  %s1 = inlined_call_operand.vmem [shape: bf16[3,64,128], index: 1, kind: input, shape index: {}]
  %s2 = inlined_call_operand.vmem [shape: bf16[32,128], index: 2, kind: output, shape index: {0}]
  %s3 = inlined_call_operand.vmem [shape: f32[2,1,128], index: 3, kind: output, shape index: {1}]
  %s4 = inlined_call_operand.vmem [shape: f32[2,1,128], index: 4, kind: output, shape index: {2}]
  %5 = xla_tuple %s2, %s3, %s4
  %s6 = sld [smem:[#allocation0]]
  $region57: #{conv_bn_relu.2} parent=0
    _
  %s8 = ssub.s32 1, %s6
  %s9 = scalar_select 0, %s8, %s6
  loop: start=0, step=1, limit=4
  $region2: #{conv_bn_relu.2} parent=0 // loop_pre_header
    _
  $region3: #{conv_bn_relu.2} parent=0 // loop_header
    %s11 = sphi 0, %s15
    %p12 = scmp.ge.s32.totalorder %s11, 4
    %s21 = sphi 0, %s23
    %s24 = sphi 0, %s21
    %s25 = sphi 0, %s24
    %s41 = sphi 0, %s25
    %s45 = sphi 0, %s45
    %s47 = sphi 0, %s45
    %s48 = sphi 0, %s47
    %s62 = sphi 0, %s48
    %s68 = sphi 0, %s70
    %s71 = sphi 0, %s68
    %s72 = sphi 0, %s71
    %s88 = sphi 0, %s72
    %s94 = sphi 0, %s96
    %s97 = sphi 0, %s94
    %s98 = sphi 0, %s97
    %s114 = sphi 0, %s98
    %s120 = sphi 0, %s122
    %s123 = sphi 0, %s120
    %s124 = sphi 0, %s123
    %s140 = sphi 0, %s124
  $region4: #{conv_bn_relu.2} parent=0 // loop_header_branch
    %14 = sbr.rel (%p12) target = $region8
  $region5: #{conv_bn_relu.2} parent=0 // loop_body
    %s16 = ssub.s32 %s11, 1
    %s17 = ssub.s32 %s11, 2
    %s18 = sadd.s32 %s11, 1
    %s19 = ssub.s32 %s11, %s18
    %p20 = scmp.eq.s32.totalorder %s19, 0
    %s22 = sadd.s32 %s21, 1
    %s23 = scalar_select %p20, %s21, %s22
    %p26 = pneg %p20
    %p27 = scmp.eq.s32.totalorder %s11, 1
    %p28 = por %p26, %p27
    %p29 = scmp.ne.s32.totalorder %s21, %s24
    %p30 = scmp.eq.s32.totalorder %s11, 0
    %p31 = por %p29, %p30
    %p32 = scmp.ne.s32.totalorder %s21, %s24
    %p33 = scmp.eq.s32.totalorder %s16, 1
    %p34 = por %p32, %p33
    %p35 = scmp.ne.s32.totalorder %s24, %s25
    %p36 = scmp.eq.s32.totalorder %s16, 0
    %p37 = por %p35, %p36
    %p38 = scmp.ne.s32.totalorder %s24, %s25
    %p39 = scmp.eq.s32.totalorder %s17, 1
    %p40 = por %p38, %p39
    %p42 = scmp.ne.s32.totalorder %s25, %s41
    %p43 = scmp.eq.s32.totalorder %s17, 0
    %p44 = por %p42, %p43
    %s46 = sadd.s32 %s45, 1
    %p49 = scmp.eq.s32.totalorder %s11, 1
    %p50 = scmp.ne.s32.totalorder %s45, %s47
    %p51 = scmp.eq.s32.totalorder %s11, 0
    %p52 = por %p50, %p51
    %p53 = scmp.ne.s32.totalorder %s45, %s47
    %p54 = scmp.eq.s32.totalorder %s16, 1
    %p55 = por %p53, %p54
    %p56 = scmp.ne.s32.totalorder %s47, %s48
    %p57 = scmp.eq.s32.totalorder %s16, 0
    %p58 = por %p56, %p57
    %p59 = scmp.ne.s32.totalorder %s47, %s48
    %p60 = scmp.eq.s32.totalorder %s17, 1
    %p61 = por %p59, %p60
    %p63 = scmp.ne.s32.totalorder %s48, %s62
    %p64 = scmp.eq.s32.totalorder %s17, 0
    %p65 = por %p63, %p64
    %s66 = ssub.s32 %s11, %s18
    %p67 = scmp.eq.s32.totalorder %s66, 0
    %s69 = sadd.s32 %s68, 1
    %s70 = scalar_select %p67, %s68, %s69
    %p73 = pneg %p67
    %p74 = scmp.eq.s32.totalorder %s11, 1
    %p75 = por %p73, %p74
    %p76 = scmp.ne.s32.totalorder %s68, %s71
    %p77 = scmp.eq.s32.totalorder %s11, 0
    %p78 = por %p76, %p77
    %p79 = scmp.ne.s32.totalorder %s68, %s71
    %p80 = scmp.eq.s32.totalorder %s16, 1
    %p81 = por %p79, %p80
    %p82 = scmp.ne.s32.totalorder %s71, %s72
    %p83 = scmp.eq.s32.totalorder %s16, 0
    %p84 = por %p82, %p83
    %p85 = scmp.ne.s32.totalorder %s71, %s72
    %p86 = scmp.eq.s32.totalorder %s17, 1
    %p87 = por %p85, %p86
    %p89 = scmp.ne.s32.totalorder %s72, %s88
    %p90 = scmp.eq.s32.totalorder %s17, 0
    %p91 = por %p89, %p90
    %s92 = ssub.s32 %s11, %s18
    %p93 = scmp.eq.s32.totalorder %s92, 0
    %s95 = sadd.s32 %s94, 1
    %s96 = scalar_select %p93, %s94, %s95
    %p99 = pneg %p93
    %p100 = scmp.eq.s32.totalorder %s11, 1
    %p101 = por %p99, %p100
    %p102 = scmp.ne.s32.totalorder %s94, %s97
    %p103 = scmp.eq.s32.totalorder %s11, 0
    %p104 = por %p102, %p103
    %p105 = scmp.ne.s32.totalorder %s94, %s97
    %p106 = scmp.eq.s32.totalorder %s16, 1
    %p107 = por %p105, %p106
    %p108 = scmp.ne.s32.totalorder %s97, %s98
    %p109 = scmp.eq.s32.totalorder %s16, 0
    %p110 = por %p108, %p109
    %p111 = scmp.ne.s32.totalorder %s97, %s98
    %p112 = scmp.eq.s32.totalorder %s17, 1
    %p113 = por %p111, %p112
    %p115 = scmp.ne.s32.totalorder %s98, %s114
    %p116 = scmp.eq.s32.totalorder %s17, 0
    %p117 = por %p115, %p116
    %s118 = ssub.s32 %s11, %s18
    %p119 = scmp.eq.s32.totalorder %s118, 0
    %s121 = sadd.s32 %s120, 1
    %s122 = scalar_select %p119, %s120, %s121
    %p125 = pneg %p119
    %p126 = scmp.eq.s32.totalorder %s11, 1
    %p127 = por %p125, %p126
    %p128 = scmp.ne.s32.totalorder %s120, %s123
    %p129 = scmp.eq.s32.totalorder %s11, 0
    %p130 = por %p128, %p129
    %p131 = scmp.ne.s32.totalorder %s120, %s123
    %p132 = scmp.eq.s32.totalorder %s16, 1
    %p133 = por %p131, %p132
    %p134 = scmp.ne.s32.totalorder %s123, %s124
    %p135 = scmp.eq.s32.totalorder %s16, 0
    %p136 = por %p134, %p135
    %p137 = scmp.ne.s32.totalorder %s123, %s124
    %p138 = scmp.eq.s32.totalorder %s17, 1
    %p139 = por %p137, %p138
    %p141 = scmp.ne.s32.totalorder %s124, %s140
    %p142 = scmp.eq.s32.totalorder %s17, 0
    %p143 = por %p141, %p142
    %p144 = scmp.le.s32.totalorder 1, %s11
    %p145 = scmp.lt.s32.totalorder %s11, 3
    %p146 = pnand %p144, %p145
    %p147 = pneg %p146
    // Predicated region
    $region9: #{conv_bn_relu.2} parent=5 // pred_check
      _
    $region10: #{conv_bn_relu.2} parent=5 // pred_check_branch
      %149 = sbr.rel (%p146) target = $region12
    $region11: #{conv_bn_relu.2} parent=5 // pred_region
      %s150 = ssub.s32 %s11, 1
      // Predicated region
      $region13: #{conv_bn_relu.2} parent=11 // pred_check
        %p151 = pneg %p58
      $region14: #{conv_bn_relu.2} parent=11 // pred_check_branch
        %153 = sbr.rel (%p151) target = $region16
      $region15: #{conv_bn_relu.2} parent=11 // pred_region
        _
      $region16: #{conv_bn_relu.2} parent=11 // pred_fallthru
        _
    $region12: #{conv_bn_relu.2} parent=5 // pred_fallthru
      _
    %p154 = scmp.lt.s32.totalorder %s11, 2
    // Predicated region
    $region17: #{conv_bn_relu.2} parent=5 // pred_check
      %p155 = pneg %p154
    $region18: #{conv_bn_relu.2} parent=5 // pred_check_branch
      %157 = sbr.rel (%p155) target = $region20
    $region19: #{conv_bn_relu.2} parent=5 // pred_region
      // Predicated region
      $region21: #{conv_bn_relu.2} parent=19 // pred_check
        %p158 = pneg %p31
      $region22: #{conv_bn_relu.2} parent=19 // pred_check_branch
        %160 = sbr.rel (%p158) target = $region24
      $region23: #{conv_bn_relu.2} parent=19 // pred_region
        %p161 = scmp.lt.s32.totalorder %s11, 1
        %s162 = scalar_select %p161, %s11, 1
        %s163 = smul.addr %s162, 3
        %s164 = smul.addr %s163, 4
        %s165 = scalar_lea.vmem %s0, %s164
      $region24: #{conv_bn_relu.2} parent=19 // pred_fallthru
        _
    $region20: #{conv_bn_relu.2} parent=5 // pred_fallthru
      _
    %p166 = scmp.le.s32.totalorder 1, %s11
    %p167 = scmp.lt.s32.totalorder %s11, 3
    %p168 = pnand %p166, %p167
    %p169 = pneg %p168
    // Predicated region
    $region25: #{conv_bn_relu.2} parent=5 // pred_check
      _
    $region26: #{conv_bn_relu.2} parent=5 // pred_check_branch
      %171 = sbr.rel (%p168) target = $region28
    $region27: #{conv_bn_relu.2} parent=5 // pred_region
      %s172 = ssub.s32 %s11, 1
      %p173 = scmp.lt.s32.totalorder %s16, 1
      %s174 = scalar_select %p173, %s16, 1
      %s175 = smul.addr %s174, 3
      %s176 = smul.addr %s175, 4
      %s177 = scalar_lea.vmem %s0, %s176
      %p178 = pneg %p37
      %p179 = pneg %p34
      %p180 = pneg %p58
      %p181 = pneg %p55
      %p182 = pneg %p84
      %p183 = pneg %p81
      %s184 = smul.u32 2, %s16
      %p185 = scmp.lt.s32.totalorder %s184, 3
      %s186 = scalar_select %p185, %s184, 3
      %s187 = smul.addr %s186, 4
      %s188 = scalar_lea.vmem %s2, %s187
      %p189 = pneg %p110
      %p190 = pneg %p107
      %p191 = scmp.lt.s32.totalorder %s16, 1
      %s192 = scalar_select %p191, %s16, 1
      %s193 = scalar_lea.vmem %s3, %s192
      %p194 = pneg %p136
      %p195 = pneg %p133
      %p196 = scmp.lt.s32.totalorder %s16, 1
      %s197 = scalar_select %p196, %s16, 1
      %s198 = scalar_lea.vmem %s4, %s197
      %p199 = scmp.lt.s32.totalorder %s16, 1
      %s200 = scalar_select %p199, %s16, 1
      %s201 = smul.addr %s200, 3
      %s202 = smul.addr %s201, 4
      %s203 = scalar_lea.vmem %s0, %s202
      %s204 = smul.u32 2, %s16
      %p205 = scmp.lt.s32.totalorder %s204, 3
      %s206 = scalar_select %p205, %s204, 3
      %s207 = smul.addr %s206, 4
      %s208 = scalar_lea.vmem %s2, %s207
      %s209 = smul.u32 2, %s16
      %p210 = scmp.lt.s32.totalorder %s16, 1
      %s211 = scalar_select %p210, %s16, 1
      %s212 = scalar_lea.vmem %s3, %s211
      %p213 = scmp.lt.s32.totalorder %s16, 1
      %s214 = scalar_select %p213, %s16, 1
      %s215 = scalar_lea.vmem %s4, %s214
      %v217 = vld [vmem:[%s203] sm:$0xf]
      %v218 = vld [vmem:[%s203 + $0x4] sm:$0xf]
      %v219 = vld [vmem:[%s1] sm:$0xf]
      %v220 = vld [vmem:[%s1 + $0x4] sm:$0xf]
      %v221 = vld [vmem:[%s1 + $0x8] sm:$0xf]
      %v222 = vld [vmem:[%s1 + $0xc] sm:$0xf]
      %v223 = vld [vmem:[%s1 + $0x10] sm:$0xf]
      %v224 = vld [vmem:[%s1 + $0x14] sm:$0xf]
      %v225 = vld [vmem:[%s1 + $0x18] sm:$0xf]
      %v226 = vld [vmem:[%s1 + $0x1c] sm:$0xf]
      %v227 = vld [vmem:[%s203 + $0x8] sm:$0x1]
      %s228 = scalar_lea.vmem %s1, 32
      %v229 = vld [vmem:[%s228] sm:$0xf]
      %v230 = vld [vmem:[%s228 + $0x4] sm:$0xf]
      %v231 = vld [vmem:[%s228 + $0x8] sm:$0xf]
      %v232 = vld [vmem:[%s228 + $0xc] sm:$0xf]
      %v233 = vld [vmem:[%s228 + $0x10] sm:$0xf]
      %v234 = vld [vmem:[%s228 + $0x14] sm:$0xf]
      %v235 = vld [vmem:[%s228 + $0x18] sm:$0xf]
      %v236 = vld [vmem:[%s228 + $0x1c] sm:$0xf]
      %v240 = vunpack.c.l.b16 %v217
      %v241 = vunpack.c.l.b16 %v218
      %v242 = vunpack.c.l.b16 %v227
      %v243 = vpack.c.b16 %v241, %v240
      %v244 = vpack.c.b16 %v242, %v242
      %vm245 = vsmask.f32 7424
      %v247 = vshrl.u32 %v243, 16
      %v249 = vshll.u32 %v243, 16
      %v251 = vrot.slane %v249, 1
      %v252 = vor.u32 %v247, %v251
      %v254 = vshll.u32 %v244, 16
      %v256 = vrot.slane %v254, 1
      %v257 = vsel %vm245, %v252, %v256
      %v266 = vunpack.c.l.b16 %v229
      %v267 = vunpack.c.l.b16 %v230
      %v268 = vunpack.c.l.b16 %v231
      %v269 = vunpack.c.l.b16 %v232
      %v270 = vunpack.c.l.b16 %v233
      %v271 = vunpack.c.l.b16 %v234
      %v272 = vunpack.c.l.b16 %v235
      %v273 = vunpack.c.l.b16 %v236
      %v274 = vpack.c.b16 %v267, %v266
      %v275 = vpack.c.b16 %v269, %v268
      %v276 = vpack.c.b16 %v271, %v270
      %v277 = vpack.c.b16 %v273, %v272
      %vm282 = vcmask 523264
      %v284 = vsel %vm282, %v257, 0
      %286 = vmatprep.subr.bf16.mxu0 0
      %287 = vmatpush1.bf16.msra.mxu0 0
      %288 = vmatprep.subr.bf16.mxu0 0
      %289 = vmatpush1.bf16.msra.mxu0 0
      %290 = vmatprep.subr.bf16.mxu0 0
      %291 = vmatpush1.bf16.msra.mxu0 0
      %292 = vmatprep.subr.bf16.mxu0 0
      %293 = vmatpush1.bf16.msra.mxu0 0
      %294 = vmatprep.subr.bf16.mxu0 0
      %295 = vmatpush1.bf16.msra.mxu0 %v277
      %296 = vmatprep.subr.bf16.mxu0 0
      %297 = vmatpush1.bf16.msra.mxu0 %v276
      %298 = vmatprep.subr.bf16.mxu0 0
      %299 = vmatpush1.bf16.msra.mxu0 %v275
      %300 = vmatprep.subr.bf16.mxu0 0
      %301 = vmatpush1.bf16.msra.mxu0 %v274
      %302 = vmatprep.subr.bf16.mxu0 0
      %303 = vmatpush2.bf16.msra.mxu0 0
      %304 = vmatprep.subr.bf16.mxu0 0
      %305 = vmatpush2.bf16.msra.mxu0 0
      %306 = vmatprep.subr.bf16.mxu0 0
      %307 = vmatpush2.bf16.msra.mxu0 0
      %308 = vmatprep.subr.bf16.mxu0 0
      %309 = vmatpush2.bf16.msra.mxu0 0
      %310 = vmatprep.subr.bf16.mxu0 0
      %311 = vmatpush2.bf16.msra.mxu0 0
      %312 = vmatprep.subr.bf16.mxu0 0
      %313 = vmatpush2.bf16.msra.mxu0 0
      %314 = vmatprep.subr.bf16.mxu0 0
      %315 = vmatpush2.bf16.msra.mxu0 0
      %316 = vmatprep.subr.bf16.mxu0 0
      %317 = vmatpush2.bf16.msra.mxu0 0
      %318 = vmatprep.mubr.bf16.mxu0 0
      %319 = vmatmul.mubr.bf16.gmra.mxu0 %v284
      %v320 = vpop.f32.mrf.mxu0
      %v321 = vadd.f32 0.0, %v320
      %v322 = vpop.f32.mrf.mxu0
      %v323 = vpop.f32.mrf.mxu0
      %v324 = vadd.f32 0.0, %v323
      %v325 = vpop.f32.mrf.mxu0
      %326 = vdwg.mxu0
      %v335 = vunpack.c.l.b16 %v219
      %v336 = vunpack.c.l.b16 %v220
      %v337 = vunpack.c.l.b16 %v221
      %v338 = vunpack.c.l.b16 %v222
      %v339 = vunpack.c.l.b16 %v223
      %v340 = vunpack.c.l.b16 %v224
      %v341 = vunpack.c.l.b16 %v225
      %v342 = vunpack.c.l.b16 %v226
      %v343 = vpack.c.b16 %v336, %v335
      %v344 = vpack.c.b16 %v338, %v337
      %v345 = vpack.c.b16 %v340, %v339
      %v346 = vpack.c.b16 %v342, %v341
      %v351 = vsel %vm282, %v243, 0
      %353 = vmatprep.subr.bf16.mxu0 0
      %354 = vmatpush1.bf16.msra.mxu0 0
      %355 = vmatprep.subr.bf16.mxu0 0
      %356 = vmatpush1.bf16.msra.mxu0 0
      %357 = vmatprep.subr.bf16.mxu0 0
      %358 = vmatpush1.bf16.msra.mxu0 0
      %359 = vmatprep.subr.bf16.mxu0 0
      %360 = vmatpush1.bf16.msra.mxu0 0
      %361 = vmatprep.subr.bf16.mxu0 0
      %362 = vmatpush1.bf16.msra.mxu0 %v346
      %363 = vmatprep.subr.bf16.mxu0 0
      %364 = vmatpush1.bf16.msra.mxu0 %v345
      %365 = vmatprep.subr.bf16.mxu0 0
      %366 = vmatpush1.bf16.msra.mxu0 %v344
      %367 = vmatprep.subr.bf16.mxu0 0
      %368 = vmatpush1.bf16.msra.mxu0 %v343
      %369 = vmatprep.subr.bf16.mxu0 0
      %370 = vmatpush2.bf16.msra.mxu0 0
      %371 = vmatprep.subr.bf16.mxu0 0
      %372 = vmatpush2.bf16.msra.mxu0 0
      %373 = vmatprep.subr.bf16.mxu0 0
      %374 = vmatpush2.bf16.msra.mxu0 0
      %375 = vmatprep.subr.bf16.mxu0 0
      %376 = vmatpush2.bf16.msra.mxu0 0
      %377 = vmatprep.subr.bf16.mxu0 0
      %378 = vmatpush2.bf16.msra.mxu0 0
      %379 = vmatprep.subr.bf16.mxu0 0
      %380 = vmatpush2.bf16.msra.mxu0 0
      %381 = vmatprep.subr.bf16.mxu0 0
      %382 = vmatpush2.bf16.msra.mxu0 0
      %383 = vmatprep.subr.bf16.mxu0 0
      %384 = vmatpush2.bf16.msra.mxu0 0
      %385 = vmatprep.mubr.bf16.mxu0 0
      %386 = vmatmul.mubr.bf16.gmra.mxu0 %v351
      %v387 = vpop.f32.mrf.mxu0
      %v388 = vadd.f32 %v321, %v387
      %v389 = vpop.f32.mrf.mxu0
      %v390 = vpop.f32.mrf.mxu0
      %v391 = vadd.f32 %v324, %v390
      %v392 = vpop.f32.mrf.mxu0
      %393 = vdwg.mxu0
      %v394 = vld [vmem:[%s203] sm:$0xe]
      %s395 = scalar_lea.vmem %s1, 64
      %v396 = vld [vmem:[%s395] sm:$0xf]
      %v397 = vld [vmem:[%s395 + $0x4] sm:$0xf]
      %v398 = vld [vmem:[%s395 + $0x8] sm:$0xf]
      %v399 = vld [vmem:[%s395 + $0xc] sm:$0xf]
      %v400 = vld [vmem:[%s395 + $0x10] sm:$0xf]
      %v401 = vld [vmem:[%s395 + $0x14] sm:$0xf]
      %v402 = vld [vmem:[%s395 + $0x18] sm:$0xf]
      %v403 = vld [vmem:[%s395 + $0x1c] sm:$0xf]
      %v405 = vunpack.c.l.b16 %v394
      %v406 = vpack.c.b16 %v241, %v405
      %vm407 = vcmask 1046528
      %v408 = vrot.slane %v406, 1
      %v409 = vrot.slane %v244, 1
      %v410 = vsel %vm407, %v408, %v409
      %v419 = vunpack.c.l.b16 %v396
      %v420 = vunpack.c.l.b16 %v397
      %v421 = vunpack.c.l.b16 %v398
      %v422 = vunpack.c.l.b16 %v399
      %v423 = vunpack.c.l.b16 %v400
      %v424 = vunpack.c.l.b16 %v401
      %v425 = vunpack.c.l.b16 %v402
      %v426 = vunpack.c.l.b16 %v403
      %v427 = vpack.c.b16 %v420, %v419
      %v428 = vpack.c.b16 %v422, %v421
      %v429 = vpack.c.b16 %v424, %v423
      %v430 = vpack.c.b16 %v426, %v425
      %v436 = vsel %vm282, %v410, 0
      %438 = vmatprep.subr.bf16.mxu0 0
      %439 = vmatpush1.bf16.msra.mxu0 0
      %440 = vmatprep.subr.bf16.mxu0 0
      %441 = vmatpush1.bf16.msra.mxu0 0
      %442 = vmatprep.subr.bf16.mxu0 0
      %443 = vmatpush1.bf16.msra.mxu0 0
      %444 = vmatprep.subr.bf16.mxu0 0
      %445 = vmatpush1.bf16.msra.mxu0 0
      %446 = vmatprep.subr.bf16.mxu0 0
      %447 = vmatpush1.bf16.msra.mxu0 %v430
      %448 = vmatprep.subr.bf16.mxu0 0
      %449 = vmatpush1.bf16.msra.mxu0 %v429
      %450 = vmatprep.subr.bf16.mxu0 0
      %451 = vmatpush1.bf16.msra.mxu0 %v428
      %452 = vmatprep.subr.bf16.mxu0 0
      %453 = vmatpush1.bf16.msra.mxu0 %v427
      %454 = vmatprep.subr.bf16.mxu0 0
      %455 = vmatpush2.bf16.msra.mxu0 0
      %456 = vmatprep.subr.bf16.mxu0 0
      %457 = vmatpush2.bf16.msra.mxu0 0
      %458 = vmatprep.subr.bf16.mxu0 0
      %459 = vmatpush2.bf16.msra.mxu0 0
      %460 = vmatprep.subr.bf16.mxu0 0
      %461 = vmatpush2.bf16.msra.mxu0 0
      %462 = vmatprep.subr.bf16.mxu0 0
      %463 = vmatpush2.bf16.msra.mxu0 0
      %464 = vmatprep.subr.bf16.mxu0 0
      %465 = vmatpush2.bf16.msra.mxu0 0
      %466 = vmatprep.subr.bf16.mxu0 0
      %467 = vmatpush2.bf16.msra.mxu0 0
      %468 = vmatprep.subr.bf16.mxu0 0
      %469 = vmatpush2.bf16.msra.mxu0 0
      %470 = vmatprep.mubr.bf16.mxu0 0
      %471 = vmatmul.mubr.bf16.gmra.mxu0 %v436
      %v472 = vpop.f32.mrf.mxu0
      %v473 = vadd.f32 0.0, %v472
      %v474 = vpop.f32.mrf.mxu0
      %v475 = vpop.f32.mrf.mxu0
      %v476 = vadd.f32 0.0, %v475
      %v477 = vpop.f32.mrf.mxu0
      %478 = vdwg.mxu0
      %v479 = vadd.f32 %v388, %v473
      %v480 = vadd.f32 %v391, %v476
      %v481 = vadd.f32 %v479, %v480
      %v482 = vrot.slane %v481, 4
      %v483 = vadd.f32 %v481, %v482
      %v484 = vrot.slane %v483, 2
      %v485 = vadd.f32 %v483, %v484
      %v486 = vrot.slane %v485, 1
      %v487 = vadd.f32 %v485, %v486
      %488 = vst [vmem:[%s212] sm:$0x1] %v487
      %v489 = vmul.f32 %v479, %v479
      %v490 = vmul.f32 %v480, %v480
      %v491 = vadd.f32 %v489, %v490
      %v492 = vrot.slane %v491, 4
      %v493 = vadd.f32 %v491, %v492
      %v494 = vrot.slane %v493, 2
      %v495 = vadd.f32 %v493, %v494
      %v496 = vrot.slane %v495, 1
      %v497 = vadd.f32 %v495, %v496
      %498 = vst [vmem:[%s215] sm:$0x1] %v497
      %v499 = vpack.c.bf16 %v480, %v479
      %v501 = vunpack.c.l.b16 %v499
      %v502 = vunpack.c.h.b16 %v499
      %v503 = vpack.c.b16 %v501, %v501
      %v504 = vpack.c.b16 %v502, %v502
      %507 = vst [vmem:[%s208] sm:$0xf] %v503
      %508 = vst [vmem:[%s208 + $0x4] sm:$0xf] %v504
      %s509 = smul.u32 2, %s16
      %p510 = scmp.lt.s32.totalorder %s509, 3
      %s511 = scalar_select %p510, %s509, 3
      %s512 = smul.addr %s511, 4
      %s513 = scalar_lea.vmem %s2, %s512
      %p514 = scmp.lt.s32.totalorder %s16, 1
      %s515 = scalar_select %p514, %s16, 1
      %s516 = scalar_lea.vmem %s3, %s515
      %p517 = scmp.lt.s32.totalorder %s16, 1
      %s518 = scalar_select %p517, %s16, 1
      %s519 = scalar_lea.vmem %s4, %s518
      // Predicated region
      $region29: #{conv_bn_relu.2} parent=27 // pred_check
        %p520 = pneg %p81
      $region30: #{conv_bn_relu.2} parent=27 // pred_check_branch
        %522 = sbr.rel (%p520) target = $region32
      $region31: #{conv_bn_relu.2} parent=27 // pred_region
        %s523 = smul.u32 2, %s16
      $region32: #{conv_bn_relu.2} parent=27 // pred_fallthru
        _
      // Predicated region
      $region33: #{conv_bn_relu.2} parent=27 // pred_check
        %p524 = pneg %p107
      $region34: #{conv_bn_relu.2} parent=27 // pred_check_branch
        %526 = sbr.rel (%p524) target = $region36
      $region35: #{conv_bn_relu.2} parent=27 // pred_region
        _
      $region36: #{conv_bn_relu.2} parent=27 // pred_fallthru
        _
      // Predicated region
      $region37: #{conv_bn_relu.2} parent=27 // pred_check
        %p527 = pneg %p133
      $region38: #{conv_bn_relu.2} parent=27 // pred_check_branch
        %529 = sbr.rel (%p527) target = $region40
      $region39: #{conv_bn_relu.2} parent=27 // pred_region
        _
      $region40: #{conv_bn_relu.2} parent=27 // pred_fallthru
        _
    $region28: #{conv_bn_relu.2} parent=5 // pred_fallthru
      _
    %p530 = scmp.le.s32.totalorder 2, %s11
    // Predicated region
    $region41: #{conv_bn_relu.2} parent=5 // pred_check
      %p531 = pneg %p530
    $region42: #{conv_bn_relu.2} parent=5 // pred_check_branch
      %533 = sbr.rel (%p531) target = $region44
    $region43: #{conv_bn_relu.2} parent=5 // pred_region
      %s534 = ssub.s32 %s11, 2
      // Predicated region
      $region45: #{conv_bn_relu.2} parent=43 // pred_check
        %p535 = pneg %p87
      $region46: #{conv_bn_relu.2} parent=43 // pred_check_branch
        %537 = sbr.rel (%p535) target = $region48
      $region47: #{conv_bn_relu.2} parent=43 // pred_region
        %s538 = smul.u32 2, %s17
        %p539 = scmp.lt.s32.totalorder %s538, 3
        %s540 = scalar_select %p539, %s538, 3
        %s541 = smul.addr %s540, 4
        %s542 = scalar_lea.vmem %s2, %s541
      $region48: #{conv_bn_relu.2} parent=43 // pred_fallthru
        _
      // Predicated region
      $region49: #{conv_bn_relu.2} parent=43 // pred_check
        %p543 = pneg %p113
      $region50: #{conv_bn_relu.2} parent=43 // pred_check_branch
        %545 = sbr.rel (%p543) target = $region52
      $region51: #{conv_bn_relu.2} parent=43 // pred_region
        %p546 = scmp.lt.s32.totalorder %s17, 1
        %s547 = scalar_select %p546, %s17, 1
        %s548 = scalar_lea.vmem %s3, %s547
      $region52: #{conv_bn_relu.2} parent=43 // pred_fallthru
        _
      // Predicated region
      $region53: #{conv_bn_relu.2} parent=43 // pred_check
        %p549 = pneg %p139
      $region54: #{conv_bn_relu.2} parent=43 // pred_check_branch
        %551 = sbr.rel (%p549) target = $region56
      $region55: #{conv_bn_relu.2} parent=43 // pred_region
        %p552 = scmp.lt.s32.totalorder %s17, 1
        %s553 = scalar_select %p552, %s17, 1
        %s554 = scalar_lea.vmem %s4, %s553
      $region56: #{conv_bn_relu.2} parent=43 // pred_fallthru
        _
    $region44: #{conv_bn_relu.2} parent=5 // pred_fallthru
      _
  $region6: #{conv_bn_relu.2} parent=0 // loop_footer
    %s15 = sadd.s32 1, %s11
  $region7: #{conv_bn_relu.2} parent=0 // loop_footer_branch
    %10 = sbr.rel target = $region3
  $region8: #{conv_bn_relu.2} parent=0 // loop_exit
    _

</llo_original>
